<compile_context>
chip_gen: v7x
topology: tpu7x:2x2x1
jax: 0.10.0
libtpu: 0.0.40
codegen_flags: <defaults>
</compile_context>

<pallas_src>
import functools
import math

import numpy as np

import jax
import jax.numpy as jnp
from jax.experimental import pallas as pl
from jax.experimental.pallas import tpu as pltpu

LN2 = float(np.log(2.0))

_TM_TARGET = 1024      # packed super-rows per grid step (fits v5e scoped VMEM)
_MIN_GRID_STEPS = 4    # aim for >=4 grid steps so v7x's 2 TCs both get work


def _round_up(x, m):
    return (x + m - 1) // m * m


def _pack_factor(dims, lane=128):
    """Smallest P such that P*d is a multiple of `lane` for every d in dims."""
    p = 1
    for d in dims:
        p = math.lcm(p, lane // math.gcd(int(d), lane))
    return p


def mlp_kernel(x_ref, w1_ref, b1_ref, w2_ref, b2_ref, o_ref, *, compute_dtype):
    """One row-tile of the 2-layer MLP on lane-dense packed operands."""
    x = x_ref[...]
    w1 = w1_ref[...]
    w2 = w2_ref[...]
    if np.dtype(compute_dtype) != np.dtype(jnp.float32):
        # In-register cast only: refs (and HBM traffic) stay f32, so the
        # (8,128) f32 tiling is unchanged; the MXU runs single-pass bf16
        # with f32 accumulation (v5e MXU-bound mitigation).
        x = x.astype(compute_dtype)
        w1 = w1.astype(compute_dtype)
        w2 = w2.astype(compute_dtype)

    # Layer 1: x @ W1 + b1, then softplus.  The "- ln 2" of shifted_softplus
    # is folded into the layer-2 bias by the wrapper, so plain softplus is exact.
    h = jnp.dot(x, w1, preferred_element_type=jnp.float32) + b1_ref[...]
    h = jnp.maximum(h, 0.0) + jnp.log1p(jnp.exp(-jnp.abs(h)))   # stable softplus

    if np.dtype(compute_dtype) != np.dtype(jnp.float32):
        h = h.astype(compute_dtype)

    # Layer 2: h @ W2 + b2' (no activation), f32 accumulation.
    y = jnp.dot(h, w2_ref[...].astype(h.dtype) if False else w2,
                preferred_element_type=jnp.float32) + b2_ref[...]
    o_ref[...] = y.astype(o_ref.dtype)


def make_mlp_forward(w1, b1, w2, b2, *, tm_target=_TM_TARGET,
                     compute_dtype=jnp.float32, min_grid_steps=_MIN_GRID_STEPS):
    """Build a forward closure with the packed weight tables precomputed ONCE.

    w1: (n_in, n_hidden), w2: (n_hidden, n_out); biases (n_hidden,) / (n_out,)
    or (1, n_*).  Returns forward(x) for x of shape (..., n_in), float32.
    """
    w1 = np.asarray(w1, np.float32)
    b1 = np.asarray(b1, np.float32).reshape(1, -1)
    w2 = np.asarray(w2, np.float32)
    b2 = np.asarray(b2, np.float32).reshape(1, -1)
    n_in, n_hidden = w1.shape
    n_out = w2.shape[1]

    # ---- lane-dense packing factor: P rows -> one super-row ----------------
    p = _pack_factor((n_in, n_hidden, n_out))          # == 16 for (32, 16, 8)
    k_in, k_hid, k_out = p * n_in, p * n_hidden, p * n_out

    # ---- one-time host-side weight packing (no per-call XLA prep) ----------
    eye = np.eye(p, dtype=np.float32)
    w1_bd_np = np.kron(eye, w1)                        # (k_in,  k_hid)
    w2_bd_np = np.kron(eye, w2)                        # (k_hid, k_out)
    b1_bd_np = np.tile(b1, (1, p))                     # (1, k_hid)
    # Fold shifted_softplus' "- ln 2" into the second-layer bias:
    #   (softplus(h) - ln2) @ W2 + b2 == softplus(h) @ W2 + (b2 - ln2*colsum(W2))
    b2_bd_np = np.tile(b2, (1, p)) - LN2 * np.sum(w2_bd_np, axis=0, keepdims=True)

    w1_bd = jnp.asarray(w1_bd_np)
    w2_bd = jnp.asarray(w2_bd_np)
    b1_bd = jnp.asarray(b1_bd_np)
    b2_bd = jnp.asarray(b2_bd_np)
    # Unpacked copies for the (<p rows) tail path.
    w1_j, b1_j, w2_j, b2_j = map(jnp.asarray, (w1, b1, w2, b2))

    kernel = functools.partial(mlp_kernel, compute_dtype=compute_dtype)

    def _run_packed(xm):
        """xm: (n_main, n_in) with n_main % p == 0.  Zero-copy wrapper."""
        nr = xm.shape[0] // p
        xp = xm.reshape(nr, k_in)                      # free contiguous reshape

        if nr < 8:
            tm = nr                                    # block == full array dim
        else:
            # >= min_grid_steps steps (v7x TC parity), sublane-aligned, capped.
            tm = min(tm_target,
                     _round_up((nr + min_grid_steps - 1) // min_grid_steps, 8))
        steps = -(-nr // tm)                           # ragged last block is OK

        # Deeper pipeline on the streamed rows only when it can matter.
        x_spec_kw = {"pipeline_mode": pl.Buffered(3)} if steps >= 3 else {}

        out_p = pl.pallas_call(
            kernel,
            out_shape=jax.ShapeDtypeStruct((nr, k_out), xm.dtype),
            grid=(steps,),
            in_specs=[
                pl.BlockSpec((tm, k_in), lambda i: (i, 0), **x_spec_kw),  # streamed
                pl.BlockSpec((k_in, k_hid), lambda i: (0, 0)),            # resident
                pl.BlockSpec((1, k_hid), lambda i: (0, 0)),
                pl.BlockSpec((k_hid, k_out), lambda i: (0, 0)),
                pl.BlockSpec((1, k_out), lambda i: (0, 0)),
            ],
            out_specs=pl.BlockSpec((tm, k_out), lambda i: (i, 0)),
            compiler_params=pltpu.CompilerParams(
                dimension_semantics=("parallel",),      # rows shard across TCs
                vmem_limit_bytes=32 * 1024 * 1024,      # safe on v5e/v6e/v7x
            ),
        )(xp, w1_bd, b1_bd, w2_bd, b2_bd)
        return out_p.reshape(nr * p, n_out)             # free reshape

    def _run_tail(xt):
        """Plain-JAX path for the < p leftover rows (negligible work)."""
        h = xt @ w1_j + b1_j
        h = jnp.maximum(h, 0.0) + jnp.log1p(jnp.exp(-jnp.abs(h))) - LN2
        return h @ w2_j + b2_j

    @jax.jit
    def forward(x):
        x = x.astype(jnp.float32)
        lead = x.shape[:-1]
        x2d = x.reshape(-1, n_in)
        n = x2d.shape[0]
        n_main = (n // p) * p
        if n_main == n:
            y2d = _run_packed(x2d)                       # zero-copy fast path
        elif n_main == 0:
            y2d = _run_tail(x2d)
        else:
            # Only the (small) output gets concatenated; no full-input pad.
            y2d = jnp.concatenate(
                [_run_packed(x2d[:n_main]), _run_tail(x2d[n_main:])], axis=0)
        return y2d.reshape(*lead, n_out)

    return forward


def mlp_reference(x, w1, b1, w2, b2):
    """Pure-JAX reference matching the PyTorch module's math."""
    h = x @ w1 + b1.reshape(1, -1)
    h = jnp.maximum(h, 0.0) + jnp.log1p(jnp.exp(-jnp.abs(h))) - LN2
    return h @ w2 + b2.reshape(1, -1)


def init_mlp_params(key, n_in, n_out, n_layers=2, n_hidden=None):
    """Xavier-uniform weights / zero biases, matching the pyramidal
    n_neurons construction of the PyTorch module."""
    if n_hidden is None:
        c = n_in
        n_neurons = []
        for _ in range(n_layers):
            n_neurons.append(c)
            c = max(n_out, c // 2)
        n_neurons.append(n_out)
    else:
        if isinstance(n_hidden, int):
            n_hidden = [n_hidden] * (n_layers - 1)
        n_neurons = [n_in] + n_hidden + [n_out]

    params = []
    for i in range(len(n_neurons) - 1):
        fan_in, fan_out = n_neurons[i], n_neurons[i + 1]
        key, sub = jax.random.split(key)
        limit = float(np.sqrt(6.0 / (fan_in + fan_out)))
        w = jax.random.uniform(sub, (fan_in, fan_out), jnp.float32, -limit, limit)
        b = jnp.zeros((1, fan_out), jnp.float32)
        params.append((w, b))
    return params


if __name__ == "__main__":
    key = jax.random.PRNGKey(0)
    n_in, n_out, n_layers = 32, 8, 2     # pyramidal: [32, 16, 8]

    k_x, k_p, k_x2 = jax.random.split(key, 3)
    (w1, b1), (w2, b2) = init_mlp_params(k_p, n_in, n_out, n_layers=n_layers)

    fwd = make_mlp_forward(w1, b1, w2, b2)   # weights packed once, here

    # Small shape from the module spec: batch=2, seq=8, features=32.
    x = jax.random.normal(k_x, (2, 8, n_in), jnp.float32)
    out = fwd(x)
    jax.block_until_ready(out)
    assert out.shape == (2, 8, n_out)
    ref = mlp_reference(x, w1, b1, w2, b2)
    np.testing.assert_allclose(np.asarray(out), np.asarray(ref),
                               rtol=1e-5, atol=1e-5)

    # Multi-step grid (exercises Buffered(3) pipeline + "parallel" row axis).
    x2 = jax.random.normal(k_x2, (64, 128, n_in), jnp.float32)
    out2 = fwd(x2)
    jax.block_until_ready(out2)
    ref2 = mlp_reference(x2, w1, b1, w2, b2)
    np.testing.assert_allclose(np.asarray(out2), np.asarray(ref2),
                               rtol=1e-5, atol=1e-5)

    # bf16-dot variant (v5e MXU-bound mitigation): same HBM bytes, relaxed tol.
    fwd_bf16 = make_mlp_forward(w1, b1, w2, b2, compute_dtype=jnp.bfloat16)
    out3 = fwd_bf16(x2)
    jax.block_until_ready(out3)
    np.testing.assert_allclose(np.asarray(out3), np.asarray(ref2),
                               rtol=1e-1, atol=1e-1)

    print("KERNEL_OK")
</pallas_src>

<mosaic_0001>
module attributes {stable_mosaic.version = 11 : i64} {
  func.func @mlp_kernel(%arg0: i32, %arg1: memref<1x512xf32, #tpu.memory_space<vmem>>, %arg2: memref<512x256xf32, #tpu.memory_space<vmem>>, %arg3: memref<1x256xf32, #tpu.memory_space<vmem>>, %arg4: memref<256x128xf32, #tpu.memory_space<vmem>>, %arg5: memref<1x128xf32, #tpu.memory_space<vmem>>, %arg6: memref<1x128xf32, #tpu.memory_space<vmem>>) attributes {dimension_semantics = [#tpu.dimension_semantics<parallel>], iteration_bounds = array<i64: 1>, scalar_prefetch = 0 : i64, scratch_operands = 0 : i64, tpu.core_type = #tpu.core_type<tc>, window_params = [{transform_indices = @transform_0, window_bounds = array<i64: 1, 512>}, {pipeline_mode = #tpu.pipeline_mode<synchronous>, transform_indices = @transform_1, window_bounds = array<i64: 512, 256>}, {pipeline_mode = #tpu.pipeline_mode<synchronous>, transform_indices = @transform_2, window_bounds = array<i64: 1, 256>}, {pipeline_mode = #tpu.pipeline_mode<synchronous>, transform_indices = @transform_3, window_bounds = array<i64: 256, 128>}, {pipeline_mode = #tpu.pipeline_mode<synchronous>, transform_indices = @transform_4, window_bounds = array<i64: 1, 128>}, {transform_indices = @transform_5, window_bounds = array<i64: 1, 128>}]} {
    %c0 = arith.constant 0 : index
    %c0_0 = arith.constant 0 : index
    %0 = vector.load %arg1[%c0, %c0_0] : memref<1x512xf32, #tpu.memory_space<vmem>>, vector<1x512xf32>
    %c0_1 = arith.constant 0 : index
    %c0_2 = arith.constant 0 : index
    %1 = vector.load %arg2[%c0_1, %c0_2] : memref<512x256xf32, #tpu.memory_space<vmem>>, vector<512x256xf32>
    %c0_3 = arith.constant 0 : index
    %c0_4 = arith.constant 0 : index
    %2 = vector.load %arg4[%c0_3, %c0_4] : memref<256x128xf32, #tpu.memory_space<vmem>>, vector<256x128xf32>
    %cst = arith.constant dense<0.000000e+00> : vector<1x256xf32>
    %3 = tpu.matmul %0, %1, %cst {dimension_numbers = #tpu.dot_dimension_numbers<[1], [0], [0], [1], [0, 0, 1, 1], [], []>} : vector<1x512xf32>, vector<512x256xf32>, vector<1x256xf32> -> vector<1x256xf32>
    %c0_5 = arith.constant 0 : index
    %c0_6 = arith.constant 0 : index
    %4 = vector.load %arg3[%c0_5, %c0_6] : memref<1x256xf32, #tpu.memory_space<vmem>>, vector<1x256xf32>
    %5 = arith.addf %3, %4 : vector<1x256xf32>
    %cst_7 = arith.constant 0.000000e+00 : f32
    %6 = vector.broadcast %cst_7 : f32 to vector<1x256xf32>
    %7 = arith.maximumf %5, %6 : vector<1x256xf32>
    %8 = math.absf %5 : vector<1x256xf32>
    %cst_8 = arith.constant 0.000000e+00 : f32
    %9 = vector.broadcast %cst_8 : f32 to vector<1x256xf32>
    %10 = arith.subf %9, %8 : vector<1x256xf32>
    %11 = math.exp %10 : vector<1x256xf32>
    %12 = math.log1p %11 : vector<1x256xf32>
    %13 = arith.addf %7, %12 : vector<1x256xf32>
    %cst_9 = arith.constant dense<0.000000e+00> : vector<1x128xf32>
    %14 = tpu.matmul %13, %2, %cst_9 {dimension_numbers = #tpu.dot_dimension_numbers<[1], [0], [0], [1], [0, 0, 1, 1], [], []>} : vector<1x256xf32>, vector<256x128xf32>, vector<1x128xf32> -> vector<1x128xf32>
    %c0_10 = arith.constant 0 : index
    %c0_11 = arith.constant 0 : index
    %15 = vector.load %arg5[%c0_10, %c0_11] : memref<1x128xf32, #tpu.memory_space<vmem>>, vector<1x128xf32>
    %16 = arith.addf %14, %15 : vector<1x128xf32>
    %c0_12 = arith.constant 0 : index
    %c0_13 = arith.constant 0 : index
    %17 = vector.load %arg6[%c0_12, %c0_13] : memref<1x128xf32, #tpu.memory_space<vmem>>, vector<1x128xf32>
    tpu.vector_store %arg6[%c0_12, %c0_13], %16 {strides = array<i32>} : memref<1x128xf32, #tpu.memory_space<vmem>>, vector<1x128xf32>,
    return
  }
  func.func @transform_0(%arg0: i32) -> (i32, i32) {
    %c0_i32 = arith.constant 0 : i32
    %c0_i32_0 = arith.constant 0 : i32
    return %arg0, %c0_i32 : i32, i32
  }
  func.func @transform_1(%arg0: i32) -> (i32, i32) {
    %c0_i32 = arith.constant 0 : i32
    %c0_i32_0 = arith.constant 0 : i32
    %c0_i32_1 = arith.constant 0 : i32
    return %c0_i32, %c0_i32_0 : i32, i32
  }
  func.func @transform_2(%arg0: i32) -> (i32, i32) {
    %c0_i32 = arith.constant 0 : i32
    %c0_i32_0 = arith.constant 0 : i32
    %c0_i32_1 = arith.constant 0 : i32
    return %c0_i32, %c0_i32_0 : i32, i32
  }
  func.func @transform_3(%arg0: i32) -> (i32, i32) {
    %c0_i32 = arith.constant 0 : i32
    %c0_i32_0 = arith.constant 0 : i32
    %c0_i32_1 = arith.constant 0 : i32
    return %c0_i32, %c0_i32_0 : i32, i32
  }
  func.func @transform_4(%arg0: i32) -> (i32, i32) {
    %c0_i32 = arith.constant 0 : i32
    %c0_i32_0 = arith.constant 0 : i32
    %c0_i32_1 = arith.constant 0 : i32
    return %c0_i32, %c0_i32_0 : i32, i32
  }
  func.func @transform_5(%arg0: i32) -> (i32, i32) {
    %c0_i32 = arith.constant 0 : i32
    %c0_i32_0 = arith.constant 0 : i32
    return %arg0, %c0_i32 : i32, i32
  }
}

</mosaic_0001>

<llo_original>
// kernel: forward.1
$region0: #{forward.1}
  #allocation0 [shape = 'u32[]', space=smem, size = 0x4, offset = 0x4, fixed_abs, tag = 'smem constant byte address 0x4 - core index']
  #allocation1 [shape = 'u32[144,128]{1,0:T(1,128)}', space=vmem, size = 0x12000, scoped, tag = 'internal scratch']
  %s0 = inlined_call_operand.vmem [shape: f32[1,512], index: 0, kind: input, shape index: {}]
  %s1 = inlined_call_operand.hbm [shape: f32[512,256], index: 1, kind: input, shape index: {}]
  %s2 = inlined_call_operand.vmem [shape: f32[1,256], index: 2, kind: input, shape index: {}]
  %s3 = inlined_call_operand.hbm [shape: f32[256,128], index: 3, kind: input, shape index: {}]
  %s4 = inlined_call_operand.vmem [shape: f32[1,128], index: 4, kind: input, shape index: {}]
  %s5 = inlined_call_operand.vmem [shape: f32[1,128], index: 5, kind: output, shape index: {}]
  %s6 = sld [smem:[#allocation0]]
  $region38: #{forward.1} parent=0
    _
  %s8 = ssub.s32 1, %s6
  %s9 = scalar_select 0, %s8, %s6
  $region1: #{forward.1} parent=0
    #allocation2 [shape = 'u8[524288]{0}', space=vmem, size = 0x80000, scoped, tag = 'input window, operand 1, single buffered']
    #allocation3 [shape = 's32[1]{0}', space=sflag, size = 0x4, scoped, tag = 'scoped memory for forward.1']
    #allocation4 [shape = 'u8[131072]{0}', space=vmem, size = 0x20000, scoped, tag = 'input window, operand 3, single buffered']
    #allocation5 [shape = 's32[1]{0}', space=sflag, size = 0x4, scoped, tag = 'scoped memory for forward.1']
    %10 = vsyncpa [#allocation3], 0
    %11 = vsyncpa [#allocation5], 0
    // Predicated region
    $region2: #{forward.1} parent=1 // pred_check
      _
    $region3: #{forward.1} parent=1 // pred_check_branch
      %13 = sbr.rel (0) target = $region5
    $region4: #{forward.1} parent=1 // pred_region
      _
    $region5: #{forward.1} parent=1 // pred_fallthru
      _
    // Predicated region
    $region6: #{forward.1} parent=1 // pred_check
      _
    $region7: #{forward.1} parent=1 // pred_check_branch
      %15 = sbr.rel (0) target = $region9
    $region8: #{forward.1} parent=1 // pred_region
      %s17 = ssub.s32 16384, 16384
      %18 = vsyncadd [#allocation3], %s17
      %s19 = sshll.u32 [#allocation2], 4
      %s20 = int_to_ptr.vmem [resolvable:$true] %s19
      %25 = dma.hbm_to_vmem [thread:$0]  %s1, 16384, %s20, [#allocation3], 256, 256, 16
    $region9: #{forward.1} parent=1 // pred_fallthru
      _
    // Predicated region
    $region10: #{forward.1} parent=1 // pred_check
      _
    $region11: #{forward.1} parent=1 // pred_check_branch
      %27 = sbr.rel (0) target = $region13
    $region12: #{forward.1} parent=1 // pred_region
      _
    $region13: #{forward.1} parent=1 // pred_fallthru
      _
    // Predicated region
    $region14: #{forward.1} parent=1 // pred_check
      _
    $region15: #{forward.1} parent=1 // pred_check_branch
      %29 = sbr.rel (0) target = $region17
    $region16: #{forward.1} parent=1 // pred_region
      %s31 = ssub.s32 4096, 4096
      %32 = vsyncadd [#allocation5], %s31
      %s33 = sshll.u32 [#allocation4], 4
      %s34 = int_to_ptr.vmem [resolvable:$true] %s33
      %39 = dma.hbm_to_vmem [thread:$0]  %s3, 4096, %s34, [#allocation5], 128, 128, 8
    $region17: #{forward.1} parent=1 // pred_fallthru
      _
    // Predicated region
    $region18: #{forward.1} parent=1 // pred_check
      _
    $region19: #{forward.1} parent=1 // pred_check_branch
      %41 = sbr.rel (0) target = $region21
    $region20: #{forward.1} parent=1 // pred_region
      _
    $region21: #{forward.1} parent=1 // pred_fallthru
      _
    // Predicated region
    $region22: #{forward.1} parent=1 // pred_check
      _
    $region23: #{forward.1} parent=1 // pred_check_branch
      %43 = sbr.rel (0) target = $region25
    $region24: #{forward.1} parent=1 // pred_region
      %44 = dma.done [#allocation3], 16384
    $region25: #{forward.1} parent=1 // pred_fallthru
      _
    // Predicated region
    $region26: #{forward.1} parent=1 // pred_check
      _
    $region27: #{forward.1} parent=1 // pred_check_branch
      %46 = sbr.rel (0) target = $region29
    $region28: #{forward.1} parent=1 // pred_region
      %47 = dma.done [#allocation5], 4096
    $region29: #{forward.1} parent=1 // pred_fallthru
      _
    %v48 = vld [vmem:[%s0] sm:$0xf]
    %v49 = vld [vmem:[#allocation2] sm:$0xff]
    %v50 = vld [vmem:[#allocation2 + $0x8] sm:$0xff]
    %v51 = vld [vmem:[#allocation2 + $0x10] sm:$0xff]
    %v52 = vld [vmem:[#allocation2 + $0x18] sm:$0xff]
    %v53 = vld [vmem:[#allocation2 + $0x20] sm:$0xff]
    %v54 = vld [vmem:[#allocation2 + $0x28] sm:$0xff]
    %v55 = vld [vmem:[#allocation2 + $0x30] sm:$0xff]
    %v56 = vld [vmem:[#allocation2 + $0x38] sm:$0xff]
    %v57 = vld [vmem:[#allocation2 + $0x40] sm:$0xff]
    %v58 = vld [vmem:[#allocation2 + $0x48] sm:$0xff]
    %v59 = vld [vmem:[#allocation2 + $0x50] sm:$0xff]
    %v60 = vld [vmem:[#allocation2 + $0x58] sm:$0xff]
    %v61 = vld [vmem:[#allocation2 + $0x60] sm:$0xff]
    %v62 = vld [vmem:[#allocation2 + $0x68] sm:$0xff]
    %v63 = vld [vmem:[#allocation2 + $0x70] sm:$0xff]
    %v64 = vld [vmem:[#allocation2 + $0x78] sm:$0xff]
    %v65 = vld [vmem:[#allocation2 + $0x80] sm:$0xff]
    %v66 = vld [vmem:[#allocation2 + $0x88] sm:$0xff]
    %v67 = vld [vmem:[#allocation2 + $0x90] sm:$0xff]
    %v68 = vld [vmem:[#allocation2 + $0x98] sm:$0xff]
    %v69 = vld [vmem:[#allocation2 + $0xa0] sm:$0xff]
    %v70 = vld [vmem:[#allocation2 + $0xa8] sm:$0xff]
    %v71 = vld [vmem:[#allocation2 + $0xb0] sm:$0xff]
    %v72 = vld [vmem:[#allocation2 + $0xb8] sm:$0xff]
    %v73 = vld [vmem:[#allocation2 + $0xc0] sm:$0xff]
    %v74 = vld [vmem:[#allocation2 + $0xc8] sm:$0xff]
    %v75 = vld [vmem:[#allocation2 + $0xd0] sm:$0xff]
    %v76 = vld [vmem:[#allocation2 + $0xd8] sm:$0xff]
    %v77 = vld [vmem:[#allocation2 + $0xe0] sm:$0xff]
    %v78 = vld [vmem:[#allocation2 + $0xe8] sm:$0xff]
    %v79 = vld [vmem:[#allocation2 + $0xf0] sm:$0xff]
    %v80 = vld [vmem:[#allocation2 + $0xf8] sm:$0xff]
    %v81 = vld [vmem:[#allocation2 + $0x100] sm:$0xff]
    %v82 = vld [vmem:[#allocation2 + $0x108] sm:$0xff]
    %v83 = vld [vmem:[#allocation2 + $0x110] sm:$0xff]
    %v84 = vld [vmem:[#allocation2 + $0x118] sm:$0xff]
    %v85 = vld [vmem:[#allocation2 + $0x120] sm:$0xff]
    %v86 = vld [vmem:[#allocation2 + $0x128] sm:$0xff]
    %v87 = vld [vmem:[#allocation2 + $0x130] sm:$0xff]
    %v88 = vld [vmem:[#allocation2 + $0x138] sm:$0xff]
    %v89 = vld [vmem:[#allocation2 + $0x140] sm:$0xff]
    %v90 = vld [vmem:[#allocation2 + $0x148] sm:$0xff]
    %v91 = vld [vmem:[#allocation2 + $0x150] sm:$0xff]
    %v92 = vld [vmem:[#allocation2 + $0x158] sm:$0xff]
    %v93 = vld [vmem:[#allocation2 + $0x160] sm:$0xff]
    %v94 = vld [vmem:[#allocation2 + $0x168] sm:$0xff]
    %v95 = vld [vmem:[#allocation2 + $0x170] sm:$0xff]
    %v96 = vld [vmem:[#allocation2 + $0x178] sm:$0xff]
    %v97 = vld [vmem:[#allocation2 + $0x180] sm:$0xff]
    %v98 = vld [vmem:[#allocation2 + $0x188] sm:$0xff]
    %v99 = vld [vmem:[#allocation2 + $0x190] sm:$0xff]
    %v100 = vld [vmem:[#allocation2 + $0x198] sm:$0xff]
    %v101 = vld [vmem:[#allocation2 + $0x1a0] sm:$0xff]
    %v102 = vld [vmem:[#allocation2 + $0x1a8] sm:$0xff]
    %v103 = vld [vmem:[#allocation2 + $0x1b0] sm:$0xff]
    %v104 = vld [vmem:[#allocation2 + $0x1b8] sm:$0xff]
    %v105 = vld [vmem:[#allocation2 + $0x1c0] sm:$0xff]
    %v106 = vld [vmem:[#allocation2 + $0x1c8] sm:$0xff]
    %v107 = vld [vmem:[#allocation2 + $0x1d0] sm:$0xff]
    %v108 = vld [vmem:[#allocation2 + $0x1d8] sm:$0xff]
    %v109 = vld [vmem:[#allocation2 + $0x1e0] sm:$0xff]
    %v110 = vld [vmem:[#allocation2 + $0x1e8] sm:$0xff]
    %v111 = vld [vmem:[#allocation2 + $0x1f0] sm:$0xff]
    %v112 = vld [vmem:[#allocation2 + $0x1f8] sm:$0xff]
    %v113 = vld [vmem:[#allocation2 + $0x200] sm:$0xff]
    %v114 = vld [vmem:[#allocation2 + $0x208] sm:$0xff]
    %v115 = vld [vmem:[#allocation2 + $0x210] sm:$0xff]
    %v116 = vld [vmem:[#allocation2 + $0x218] sm:$0xff]
    %v117 = vld [vmem:[#allocation2 + $0x220] sm:$0xff]
    %v118 = vld [vmem:[#allocation2 + $0x228] sm:$0xff]
    %v119 = vld [vmem:[#allocation2 + $0x230] sm:$0xff]
    %v120 = vld [vmem:[#allocation2 + $0x238] sm:$0xff]
    %v121 = vld [vmem:[#allocation2 + $0x240] sm:$0xff]
    %v122 = vld [vmem:[#allocation2 + $0x248] sm:$0xff]
    %v123 = vld [vmem:[#allocation2 + $0x250] sm:$0xff]
    %v124 = vld [vmem:[#allocation2 + $0x258] sm:$0xff]
    %v125 = vld [vmem:[#allocation2 + $0x260] sm:$0xff]
    %v126 = vld [vmem:[#allocation2 + $0x268] sm:$0xff]
    %v127 = vld [vmem:[#allocation2 + $0x270] sm:$0xff]
    %v128 = vld [vmem:[#allocation2 + $0x278] sm:$0xff]
    %v129 = vld [vmem:[#allocation2 + $0x280] sm:$0xff]
    %v130 = vld [vmem:[#allocation2 + $0x288] sm:$0xff]
    %v131 = vld [vmem:[#allocation2 + $0x290] sm:$0xff]
    %v132 = vld [vmem:[#allocation2 + $0x298] sm:$0xff]
    %v133 = vld [vmem:[#allocation2 + $0x2a0] sm:$0xff]
    %v134 = vld [vmem:[#allocation2 + $0x2a8] sm:$0xff]
    %v135 = vld [vmem:[#allocation2 + $0x2b0] sm:$0xff]
    %v136 = vld [vmem:[#allocation2 + $0x2b8] sm:$0xff]
    %v137 = vld [vmem:[#allocation2 + $0x2c0] sm:$0xff]
    %v138 = vld [vmem:[#allocation2 + $0x2c8] sm:$0xff]
    %v139 = vld [vmem:[#allocation2 + $0x2d0] sm:$0xff]
    %v140 = vld [vmem:[#allocation2 + $0x2d8] sm:$0xff]
    %v141 = vld [vmem:[#allocation2 + $0x2e0] sm:$0xff]
    %v142 = vld [vmem:[#allocation2 + $0x2e8] sm:$0xff]
    %v143 = vld [vmem:[#allocation2 + $0x2f0] sm:$0xff]
    %v144 = vld [vmem:[#allocation2 + $0x2f8] sm:$0xff]
    %v145 = vld [vmem:[#allocation2 + $0x300] sm:$0xff]
    %v146 = vld [vmem:[#allocation2 + $0x308] sm:$0xff]
    %v147 = vld [vmem:[#allocation2 + $0x310] sm:$0xff]
    %v148 = vld [vmem:[#allocation2 + $0x318] sm:$0xff]
    %v149 = vld [vmem:[#allocation2 + $0x320] sm:$0xff]
    %v150 = vld [vmem:[#allocation2 + $0x328] sm:$0xff]
    %v151 = vld [vmem:[#allocation2 + $0x330] sm:$0xff]
    %v152 = vld [vmem:[#allocation2 + $0x338] sm:$0xff]
    %v153 = vld [vmem:[#allocation2 + $0x340] sm:$0xff]
    %v154 = vld [vmem:[#allocation2 + $0x348] sm:$0xff]
    %v155 = vld [vmem:[#allocation2 + $0x350] sm:$0xff]
    %v156 = vld [vmem:[#allocation2 + $0x358] sm:$0xff]
    %v157 = vld [vmem:[#allocation2 + $0x360] sm:$0xff]
    %v158 = vld [vmem:[#allocation2 + $0x368] sm:$0xff]
    %v159 = vld [vmem:[#allocation2 + $0x370] sm:$0xff]
    %v160 = vld [vmem:[#allocation2 + $0x378] sm:$0xff]
    %v161 = vld [vmem:[#allocation2 + $0x380] sm:$0xff]
    %v162 = vld [vmem:[#allocation2 + $0x388] sm:$0xff]
    %v163 = vld [vmem:[#allocation2 + $0x390] sm:$0xff]
    %v164 = vld [vmem:[#allocation2 + $0x398] sm:$0xff]
    %v165 = vld [vmem:[#allocation2 + $0x3a0] sm:$0xff]
    %v166 = vld [vmem:[#allocation2 + $0x3a8] sm:$0xff]
    %v167 = vld [vmem:[#allocation2 + $0x3b0] sm:$0xff]
    %v168 = vld [vmem:[#allocation2 + $0x3b8] sm:$0xff]
    %v169 = vld [vmem:[#allocation2 + $0x3c0] sm:$0xff]
    %v170 = vld [vmem:[#allocation2 + $0x3c8] sm:$0xff]
    %v171 = vld [vmem:[#allocation2 + $0x3d0] sm:$0xff]
    %v172 = vld [vmem:[#allocation2 + $0x3d8] sm:$0xff]
    %v173 = vld [vmem:[#allocation2 + $0x3e0] sm:$0xff]
    %v174 = vld [vmem:[#allocation2 + $0x3e8] sm:$0xff]
    %v175 = vld [vmem:[#allocation2 + $0x3f0] sm:$0xff]
    %v176 = vld [vmem:[#allocation2 + $0x3f8] sm:$0xff]
    %v177 = vld [vmem:[#allocation4] sm:$0xff]
    %v178 = vld [vmem:[#allocation4 + $0x8] sm:$0xff]
    %v179 = vld [vmem:[#allocation4 + $0x10] sm:$0xff]
    %v180 = vld [vmem:[#allocation4 + $0x18] sm:$0xff]
    %v181 = vld [vmem:[#allocation4 + $0x20] sm:$0xff]
    %v182 = vld [vmem:[#allocation4 + $0x28] sm:$0xff]
    %v183 = vld [vmem:[#allocation4 + $0x30] sm:$0xff]
    %v184 = vld [vmem:[#allocation4 + $0x38] sm:$0xff]
    %v185 = vld [vmem:[#allocation4 + $0x40] sm:$0xff]
    %v186 = vld [vmem:[#allocation4 + $0x48] sm:$0xff]
    %v187 = vld [vmem:[#allocation4 + $0x50] sm:$0xff]
    %v188 = vld [vmem:[#allocation4 + $0x58] sm:$0xff]
    %v189 = vld [vmem:[#allocation4 + $0x60] sm:$0xff]
    %v190 = vld [vmem:[#allocation4 + $0x68] sm:$0xff]
    %v191 = vld [vmem:[#allocation4 + $0x70] sm:$0xff]
    %v192 = vld [vmem:[#allocation4 + $0x78] sm:$0xff]
    %v193 = vld [vmem:[#allocation4 + $0x80] sm:$0xff]
    %v194 = vld [vmem:[#allocation4 + $0x88] sm:$0xff]
    %v195 = vld [vmem:[#allocation4 + $0x90] sm:$0xff]
    %v196 = vld [vmem:[#allocation4 + $0x98] sm:$0xff]
    %v197 = vld [vmem:[#allocation4 + $0xa0] sm:$0xff]
    %v198 = vld [vmem:[#allocation4 + $0xa8] sm:$0xff]
    %v199 = vld [vmem:[#allocation4 + $0xb0] sm:$0xff]
    %v200 = vld [vmem:[#allocation4 + $0xb8] sm:$0xff]
    %v201 = vld [vmem:[#allocation4 + $0xc0] sm:$0xff]
    %v202 = vld [vmem:[#allocation4 + $0xc8] sm:$0xff]
    %v203 = vld [vmem:[#allocation4 + $0xd0] sm:$0xff]
    %v204 = vld [vmem:[#allocation4 + $0xd8] sm:$0xff]
    %v205 = vld [vmem:[#allocation4 + $0xe0] sm:$0xff]
    %v206 = vld [vmem:[#allocation4 + $0xe8] sm:$0xff]
    %v207 = vld [vmem:[#allocation4 + $0xf0] sm:$0xff]
    %v208 = vld [vmem:[#allocation4 + $0xf8] sm:$0xff]
    %v209 = vld [vmem:[%s2] sm:$0x3]
    %v211 = vlaneseq
    %v212 = vshrl.u32 %v211, 7
    %v213 = vsub.s32 0, %v212
    %v214 = vrot.slane %v48, %v213
    %v215 = vlaneseq
    %v216 = vshrl.u32 %v215, 7
    %v217 = vsub.s32 1, %v216
    %v218 = vrot.slane %v48, %v217
    %v219 = vlaneseq
    %v220 = vshrl.u32 %v219, 7
    %v221 = vsub.s32 2, %v220
    %v222 = vrot.slane %v48, %v221
    %v223 = vlaneseq
    %v224 = vshrl.u32 %v223, 7
    %v225 = vsub.s32 3, %v224
    %v226 = vrot.slane %v48, %v225
    %v232 = vlaneseq
    %v233 = vshrl.u32 %v232, 7
    %v234 = vsub.s32 0, %v233
    %v235 = vrot.slane %v209, %v234
    %v236 = vlaneseq
    %v237 = vshrl.u32 %v236, 7
    %v238 = vsub.s32 1, %v237
    %v239 = vrot.slane %v209, %v238
    %242 = vmatprep.subr.mxu0 %v50
    %243 = vmatpush1.msra.mxu0 %v49
    %244 = vmatprep.subr.mxu0 %v52
    %245 = vmatpush1.msra.mxu0 %v51
    %246 = vmatprep.subr.mxu0 %v54
    %247 = vmatpush1.msra.mxu0 %v53
    %248 = vmatprep.subr.mxu0 %v56
    %249 = vmatpush1.msra.mxu0 %v55
    %250 = vmatprep.subr.mxu0 %v58
    %251 = vmatpush1.msra.mxu0 %v57
    %252 = vmatprep.subr.mxu0 %v60
    %253 = vmatpush1.msra.mxu0 %v59
    %254 = vmatprep.subr.mxu0 %v62
    %255 = vmatpush1.msra.mxu0 %v61
    %256 = vmatprep.subr.mxu0 %v64
    %257 = vmatpush1.msra.mxu0 %v63
    %258 = vmatprep.subr.mxu0 %v66
    %259 = vmatpush1.msra.mxu0 %v65
    %260 = vmatprep.subr.mxu0 %v68
    %261 = vmatpush1.msra.mxu0 %v67
    %262 = vmatprep.subr.mxu0 %v70
    %263 = vmatpush1.msra.mxu0 %v69
    %264 = vmatprep.subr.mxu0 %v72
    %265 = vmatpush1.msra.mxu0 %v71
    %266 = vmatprep.subr.mxu0 %v74
    %267 = vmatpush1.msra.mxu0 %v73
    %268 = vmatprep.subr.mxu0 %v76
    %269 = vmatpush1.msra.mxu0 %v75
    %270 = vmatprep.subr.mxu0 %v78
    %271 = vmatpush1.msra.mxu0 %v77
    %272 = vmatprep.subr.mxu0 %v80
    %273 = vmatpush1.msra.mxu0 %v79
    %274 = vmatprep.subr.mxu0 %v82
    %275 = vmatpush1.msra.mxu0 %v81
    %276 = vmatprep.subr.mxu0 %v84
    %277 = vmatpush1.msra.mxu0 %v83
    %278 = vmatprep.subr.mxu0 %v86
    %279 = vmatpush1.msra.mxu0 %v85
    %280 = vmatprep.subr.mxu0 %v88
    %281 = vmatpush1.msra.mxu0 %v87
    %282 = vmatprep.subr.mxu0 %v90
    %283 = vmatpush1.msra.mxu0 %v89
    %284 = vmatprep.subr.mxu0 %v92
    %285 = vmatpush1.msra.mxu0 %v91
    %286 = vmatprep.subr.mxu0 %v94
    %287 = vmatpush1.msra.mxu0 %v93
    %288 = vmatprep.subr.mxu0 %v96
    %289 = vmatpush1.msra.mxu0 %v95
    %290 = vmatprep.subr.mxu0 %v98
    %291 = vmatpush1.msra.mxu0 %v97
    %292 = vmatprep.subr.mxu0 %v100
    %293 = vmatpush1.msra.mxu0 %v99
    %294 = vmatprep.subr.mxu0 %v102
    %295 = vmatpush1.msra.mxu0 %v101
    %296 = vmatprep.subr.mxu0 %v104
    %297 = vmatpush1.msra.mxu0 %v103
    %298 = vmatprep.subr.mxu0 %v106
    %299 = vmatpush1.msra.mxu0 %v105
    %300 = vmatprep.subr.mxu0 %v108
    %301 = vmatpush1.msra.mxu0 %v107
    %302 = vmatprep.subr.mxu0 %v110
    %303 = vmatpush1.msra.mxu0 %v109
    %304 = vmatprep.subr.mxu0 %v112
    %305 = vmatpush1.msra.mxu0 %v111
    %306 = vmatprep.mubr.f32.mxu0 %v218
    %307 = vmatmul.mubr.f32.gmra.mrb[0].mxu0 %v214
    %v308 = vpop.f32.mrb[0].mxu0
    %v309 = vadd.f32 %v235, %v308
    %v310 = vpop.f32.mrb[0].mxu0
    %v311 = vadd.f32 %v239, %v310
    %312 = vdwg.mxu0
    %313 = vmatprep.subr.mxu0 %v114
    %314 = vmatpush1.msra.mxu0 %v113
    %315 = vmatprep.subr.mxu0 %v116
    %316 = vmatpush1.msra.mxu0 %v115
    %317 = vmatprep.subr.mxu0 %v118
    %318 = vmatpush1.msra.mxu0 %v117
    %319 = vmatprep.subr.mxu0 %v120
    %320 = vmatpush1.msra.mxu0 %v119
    %321 = vmatprep.subr.mxu0 %v122
    %322 = vmatpush1.msra.mxu0 %v121
    %323 = vmatprep.subr.mxu0 %v124
    %324 = vmatpush1.msra.mxu0 %v123
    %325 = vmatprep.subr.mxu0 %v126
    %326 = vmatpush1.msra.mxu0 %v125
    %327 = vmatprep.subr.mxu0 %v128
    %328 = vmatpush1.msra.mxu0 %v127
    %329 = vmatprep.subr.mxu0 %v130
    %330 = vmatpush1.msra.mxu0 %v129
    %331 = vmatprep.subr.mxu0 %v132
    %332 = vmatpush1.msra.mxu0 %v131
    %333 = vmatprep.subr.mxu0 %v134
    %334 = vmatpush1.msra.mxu0 %v133
    %335 = vmatprep.subr.mxu0 %v136
    %336 = vmatpush1.msra.mxu0 %v135
    %337 = vmatprep.subr.mxu0 %v138
    %338 = vmatpush1.msra.mxu0 %v137
    %339 = vmatprep.subr.mxu0 %v140
    %340 = vmatpush1.msra.mxu0 %v139
    %341 = vmatprep.subr.mxu0 %v142
    %342 = vmatpush1.msra.mxu0 %v141
    %343 = vmatprep.subr.mxu0 %v144
    %344 = vmatpush1.msra.mxu0 %v143
    %345 = vmatprep.subr.mxu0 %v146
    %346 = vmatpush1.msra.mxu0 %v145
    %347 = vmatprep.subr.mxu0 %v148
    %348 = vmatpush1.msra.mxu0 %v147
    %349 = vmatprep.subr.mxu0 %v150
    %350 = vmatpush1.msra.mxu0 %v149
    %351 = vmatprep.subr.mxu0 %v152
    %352 = vmatpush1.msra.mxu0 %v151
    %353 = vmatprep.subr.mxu0 %v154
    %354 = vmatpush1.msra.mxu0 %v153
    %355 = vmatprep.subr.mxu0 %v156
    %356 = vmatpush1.msra.mxu0 %v155
    %357 = vmatprep.subr.mxu0 %v158
    %358 = vmatpush1.msra.mxu0 %v157
    %359 = vmatprep.subr.mxu0 %v160
    %360 = vmatpush1.msra.mxu0 %v159
    %361 = vmatprep.subr.mxu0 %v162
    %362 = vmatpush1.msra.mxu0 %v161
    %363 = vmatprep.subr.mxu0 %v164
    %364 = vmatpush1.msra.mxu0 %v163
    %365 = vmatprep.subr.mxu0 %v166
    %366 = vmatpush1.msra.mxu0 %v165
    %367 = vmatprep.subr.mxu0 %v168
    %368 = vmatpush1.msra.mxu0 %v167
    %369 = vmatprep.subr.mxu0 %v170
    %370 = vmatpush1.msra.mxu0 %v169
    %371 = vmatprep.subr.mxu0 %v172
    %372 = vmatpush1.msra.mxu0 %v171
    %373 = vmatprep.subr.mxu0 %v174
    %374 = vmatpush1.msra.mxu0 %v173
    %375 = vmatprep.subr.mxu0 %v176
    %376 = vmatpush1.msra.mxu0 %v175
    %377 = vmatprep.mubr.f32.mxu0 %v226
    %378 = vmatmul.mubr.f32.gmra.mrb[0].mxu0 %v222
    %v379 = vpop.f32.mrb[0].mxu0
    %v380 = vadd.f32 %v309, %v379
    %v381 = vpop.f32.mrb[0].mxu0
    %v382 = vadd.f32 %v311, %v381
    %383 = vdwg.mxu0
    %v384 = vmax.f32 %v380, 0.0
    %v385 = vmax.f32 %v382, 0.0
    %v386 = vand.u32 2147483647, %v380
    %v387 = vand.u32 2147483647, %v382
    %v388 = vsub.f32 0.0, %v386
    %v389 = vsub.f32 0.0, %v387
    %v390 = vmul.f32 %v388, 1.442695
    %v391 = vpow.pop %v390
    %v392 = vmul.f32 %v389, 1.442695
    %v393 = vpow.pop %v392
    %v394 = vadd.f32 %v391, 1.0
    %v395 = vlog2.pop %v394
    %v396 = vmul.f32 %v395, 0.6931472
    %v397 = vmul.f32 -0.5, %v391
    %v398 = vadd.f32 %v397, 1.0
    %v399 = vmul.f32 %v398, %v391
    %v400 = vand.u32 2147483647, %v391
    %vm401 = vcmp.lt.f32.partialorder %v400, 0.0004427343
    %v402 = vsel %vm401, %v399, %v396
    %v403 = vadd.f32 %v393, 1.0
    %v404 = vlog2.pop %v403
    %v405 = vmul.f32 %v404, 0.6931472
    %v406 = vmul.f32 -0.5, %v393
    %v407 = vadd.f32 %v406, 1.0
    %v408 = vmul.f32 %v407, %v393
    %v409 = vand.u32 2147483647, %v393
    %vm410 = vcmp.lt.f32.partialorder %v409, 0.0004427343
    %v411 = vsel %vm410, %v408, %v405
    %v412 = vadd.f32 %v384, %v402
    %v413 = vadd.f32 %v385, %v411
    %v414 = vld [vmem:[%s4] sm:$0x1]
    %415 = vmatprep.subr.mxu0 0.0
    %416 = vmatpush1.msra.mxu0 %v177
    %417 = vmatprep.subr.mxu0 0.0
    %418 = vmatpush1.msra.mxu0 %v178
    %419 = vmatprep.subr.mxu0 0.0
    %420 = vmatpush1.msra.mxu0 %v179
    %421 = vmatprep.subr.mxu0 0.0
    %422 = vmatpush1.msra.mxu0 %v180
    %423 = vmatprep.subr.mxu0 0.0
    %424 = vmatpush1.msra.mxu0 %v181
    %425 = vmatprep.subr.mxu0 0.0
    %426 = vmatpush1.msra.mxu0 %v182
    %427 = vmatprep.subr.mxu0 0.0
    %428 = vmatpush1.msra.mxu0 %v183
    %429 = vmatprep.subr.mxu0 0.0
    %430 = vmatpush1.msra.mxu0 %v184
    %431 = vmatprep.subr.mxu0 0.0
    %432 = vmatpush1.msra.mxu0 %v185
    %433 = vmatprep.subr.mxu0 0.0
    %434 = vmatpush1.msra.mxu0 %v186
    %435 = vmatprep.subr.mxu0 0.0
    %436 = vmatpush1.msra.mxu0 %v187
    %437 = vmatprep.subr.mxu0 0.0
    %438 = vmatpush1.msra.mxu0 %v188
    %439 = vmatprep.subr.mxu0 0.0
    %440 = vmatpush1.msra.mxu0 %v189
    %441 = vmatprep.subr.mxu0 0.0
    %442 = vmatpush1.msra.mxu0 %v190
    %443 = vmatprep.subr.mxu0 0.0
    %444 = vmatpush1.msra.mxu0 %v191
    %445 = vmatprep.subr.mxu0 0.0
    %446 = vmatpush1.msra.mxu0 %v192
    %447 = vmatprep.subr.mxu0 0.0
    %448 = vmatpush1.msra.mxu0 %v193
    %449 = vmatprep.subr.mxu0 0.0
    %450 = vmatpush1.msra.mxu0 %v194
    %451 = vmatprep.subr.mxu0 0.0
    %452 = vmatpush1.msra.mxu0 %v195
    %453 = vmatprep.subr.mxu0 0.0
    %454 = vmatpush1.msra.mxu0 %v196
    %455 = vmatprep.subr.mxu0 0.0
    %456 = vmatpush1.msra.mxu0 %v197
    %457 = vmatprep.subr.mxu0 0.0
    %458 = vmatpush1.msra.mxu0 %v198
    %459 = vmatprep.subr.mxu0 0.0
    %460 = vmatpush1.msra.mxu0 %v199
    %461 = vmatprep.subr.mxu0 0.0
    %462 = vmatpush1.msra.mxu0 %v200
    %463 = vmatprep.subr.mxu0 0.0
    %464 = vmatpush1.msra.mxu0 %v201
    %465 = vmatprep.subr.mxu0 0.0
    %466 = vmatpush1.msra.mxu0 %v202
    %467 = vmatprep.subr.mxu0 0.0
    %468 = vmatpush1.msra.mxu0 %v203
    %469 = vmatprep.subr.mxu0 0.0
    %470 = vmatpush1.msra.mxu0 %v204
    %471 = vmatprep.subr.mxu0 0.0
    %472 = vmatpush1.msra.mxu0 %v205
    %473 = vmatprep.subr.mxu0 0.0
    %474 = vmatpush1.msra.mxu0 %v206
    %475 = vmatprep.subr.mxu0 0.0
    %476 = vmatpush1.msra.mxu0 %v207
    %477 = vmatprep.subr.mxu0 0.0
    %478 = vmatpush1.msra.mxu0 %v208
    %479 = vmatprep.mubr.f32.mxu0 %v413
    %480 = vmatmul.mubr.f32.gmra.mrb[0].mxu0 %v412
    %v481 = vpop.f32.mrb[0].mxu0
    %v482 = vadd.f32 %v414, %v481
    %v483 = vpop.f32.mrb[0].mxu0
    %484 = vdwg.mxu0
    %485 = vst [vmem:[%s5] sm:$0x1] %v482
    // Predicated region
    $region30: #{forward.1} parent=1 // pred_check
      _
    $region31: #{forward.1} parent=1 // pred_check_branch
      %487 = sbr.rel (0) target = $region33
    $region32: #{forward.1} parent=1 // pred_region
      _
    $region33: #{forward.1} parent=1 // pred_fallthru
      _
    // Predicated region
    $region34: #{forward.1} parent=1 // pred_check
      _
    $region35: #{forward.1} parent=1 // pred_check_branch
      %489 = sbr.rel (0) target = $region37
    $region36: #{forward.1} parent=1 // pred_region
      _
    $region37: #{forward.1} parent=1 // pred_fallthru
      _
    %490 = vsyncpa [#allocation3], 1
    %491 = vsyncpa [#allocation5], 1

</llo_original>
